<compile_context>
chip_gen: v7x
topology: tpu7x:2x2x1
jax: 0.10.0
libtpu: 0.0.40
codegen_flags: <defaults>
</compile_context>

<pallas_src>
import numpy as np
import jax
import jax.numpy as jnp
from jax.experimental import pallas as pl
from jax.experimental.pallas import tpu as pltpu

NEG_SLOPE = 0.01   # nn.LeakyReLU default negative_slope
EPS = 1e-5         # nn.BatchNorm2d default eps


# ------------------------------ Pallas kernel ------------------------------ #
def _leaky(v):
    return jnp.where(v >= 0, v, NEG_SLOPE * v)


def _shift_down(p):
    # out[0] = 0, out[i] = p[i-1]  (zero row == implicit top padding)
    return jnp.concatenate([jnp.zeros_like(p[:1]), p[:-1]], axis=0)


def _shift_up(p):
    # out[i] = p[i+1], out[-1] = 0  (zero row == implicit bottom padding)
    return jnp.concatenate([p[1:], jnp.zeros_like(p[:1])], axis=0)


def _erblock_kernel(x_ref, w1_ref, w2_ref, w3_ref, b_ref, o_ref):
    """One image per grid step.  All convs are lane-packed matmuls:
       lane = (w, c);  kw taps live inside the weights;  kh taps are handled by
       at most one zero-padded row shift of the per-tap partial sums."""
    f32 = jnp.float32
    b = b_ref[...]                                           # (3, Wo*Cout) f32

    # ---- layer 1: stride-2 RepVGGBlock (2 matmuls) --------------------------
    # x lanes: [even input row (w, ci) | odd input row (w, ci)] per row-pair ho.
    x = x_ref[0]                                             # (Ho, 2*W*Cin) bf16
    acc1 = jnp.dot(x, w1_ref[0], preferred_element_type=f32)  # kh=1 (even) + kh=2 (odd)
    p0 = jnp.dot(x, w1_ref[1], preferred_element_type=f32)    # kh=0 (odd half of pair ho-1)
    y1 = _leaky(acc1 + _shift_down(p0) + b[0:1])
    y1b = y1.astype(jnp.bfloat16)                            # single cast per layer

    # ---- layer 2: stride-1 RepVGGBlock (3 matmuls, one per kh) --------------
    q0 = jnp.dot(y1b, w2_ref[0], preferred_element_type=f32)
    q1 = jnp.dot(y1b, w2_ref[1], preferred_element_type=f32)
    q2 = jnp.dot(y1b, w2_ref[2], preferred_element_type=f32)
    y2 = _leaky(q1 + _shift_down(q0) + _shift_up(q2) + b[1:2])
    y2b = y2.astype(jnp.bfloat16)

    # ---- layer 3: stride-1 RepVGGBlock (3 matmuls) ---------------------------
    r0 = jnp.dot(y2b, w3_ref[0], preferred_element_type=f32)
    r1 = jnp.dot(y2b, w3_ref[1], preferred_element_type=f32)
    r2 = jnp.dot(y2b, w3_ref[2], preferred_element_type=f32)
    y3 = _leaky(r1 + _shift_down(r0) + _shift_up(r2) + b[2:3])
    o_ref[0] = y3.astype(o_ref.dtype)                        # dense (Ho, Wo*Cout) store


# ----------------------- parameter setup (module spec) ---------------------- #
def init_bn(key, C):
    k1, k2, k3, k4 = jax.random.split(key, 4)
    gamma = jax.random.uniform(k1, (C,), minval=0.5, maxval=1.5)
    beta = jax.random.normal(k2, (C,)) * 0.1
    mean = jax.random.normal(k3, (C,)) * 0.1
    var = jax.random.uniform(k4, (C,), minval=0.5, maxval=1.5)
    return gamma, beta, mean, var


def init_repvgg(key, cin, cout, stride):
    """Deterministic parameters for one RepVGGBlock (non-deploy branches)."""
    ks = jax.random.split(key, 7)
    return dict(
        w3=jax.random.normal(ks[0], (cout, cin, 3, 3)) * 0.1,   # conv2.conv (3x3, bias=True)
        b3=jax.random.normal(ks[1], (cout,)) * 0.1,
        bn3=init_bn(ks[2], cout),                                # conv2.bn
        w1=jax.random.normal(ks[3], (cout, cin, 1, 1)) * 0.1,   # conv1.conv (1x1, bias=True)
        b1=jax.random.normal(ks[4], (cout,)) * 0.1,
        bn1=init_bn(ks[5], cout),                                # conv1.bn
        bn0=init_bn(ks[6], cin) if (cin == cout and stride == 1) else None,  # bn_elective
        stride=stride,
    )


def _fuse_repvgg(p):
    """Fold 3x3-conv+bias+BN, 1x1-conv+bias+BN and optional identity-BN into a
    single 3x3 conv kernel (OIHW) + bias (eval-mode BN), like transform()."""
    w3, b3 = p['w3'], p['b3']
    g3, be3, m3, v3 = p['bn3']
    s3 = g3 / jnp.sqrt(v3 + EPS)
    K = w3 * s3[:, None, None, None]
    B = be3 + s3 * (b3 - m3)

    w1, b1 = p['w1'], p['b1']
    g1, be1, m1, v1 = p['bn1']
    s1 = g1 / jnp.sqrt(v1 + EPS)
    K = K + jnp.pad(w1 * s1[:, None, None, None], ((0, 0), (0, 0), (1, 1), (1, 1)))
    B = B + be1 + s1 * (b1 - m1)

    if p['bn0'] is not None:
        g0, be0, m0, v0 = p['bn0']
        s0 = g0 / jnp.sqrt(v0 + EPS)
        cin = w3.shape[1]
        idk = jnp.zeros((cin, cin, 3, 3), jnp.float32)
        idk = idk.at[jnp.arange(cin), jnp.arange(cin), 1, 1].set(1.0)
        K = K + idk * s0[:, None, None, None]
        B = B + be0 - m0 * s0
    return K.astype(jnp.float32), B.astype(jnp.float32)


# ------------------------- one-time weight packing -------------------------- #
def _pack_stride2_weight(K, Cin, Cout, W):
    """Stride-2 3x3 conv, padding 1, even W.  Input lanes hold a row PAIR
    (even row | odd row) of the unpadded image; output lanes are (wo, co).
      plane 0: kh=1 taps (even half) + kh=2 taps (odd half)          -> aligned
      plane 1: kh=0 taps (odd half of pair ho-1)        -> applied row-shifted
    kw is folded into the lane block structure (implicit left zero pad)."""
    Wo = W // 2
    w = np.zeros((2, 2 * W * Cin, Wo * Cout), np.float32)
    for wo in range(Wo):
        for kw in range(3):
            w_in = 2 * wo + kw - 1
            if not (0 <= w_in < W):
                continue                       # implicit width zero-padding
            r0, c0 = w_in * Cin, wo * Cout
            w[0, r0:r0 + Cin, c0:c0 + Cout] = K[:, :, 1, kw].T              # even, kh=1
            w[0, W * Cin + r0:W * Cin + r0 + Cin, c0:c0 + Cout] = K[:, :, 2, kw].T  # odd, kh=2
            w[1, W * Cin + r0:W * Cin + r0 + Cin, c0:c0 + Cout] = K[:, :, 0, kw].T  # odd, kh=0
    return w


def _pack_stride1_weight(K, C, Wo):
    """Stride-1 3x3 conv, padding 1: (3, Wo*C, Wo*C) block matrices, one per kh,
    with kw folded into the (w, c) lane blocks (implicit width zero padding)."""
    w = np.zeros((3, Wo * C, Wo * C), np.float32)
    for kh in range(3):
        for wo in range(Wo):
            for kw in range(3):
                w_in = wo + kw - 1
                if not (0 <= w_in < Wo):
                    continue
                w[kh, w_in * C:(w_in + 1) * C, wo * C:(wo + 1) * C] = K[:, :, kh, kw].T
    return w


# ------------------------------ forward builder ----------------------------- #
def make_erblock_forward(blocks, N, H, W):
    """Fold/pack all RepVGG parameters ONCE and return a jitted forward(x_nchw)."""
    p1, p2, p3 = blocks
    cin = p1['w3'].shape[1]
    cout = p1['w3'].shape[0]
    assert H % 2 == 0 and W % 2 == 0
    Ho, Wo = H // 2, W // 2
    Lin = 2 * W * cin            # layer-1 contraction lanes (dense, no padding)
    Lmid = Wo * cout             # intermediate / output lanes (dense)

    K1, B1 = _fuse_repvgg(p1)    # eval-mode BN folding (transform() semantics)
    K2, B2 = _fuse_repvgg(p2)
    K3, B3 = _fuse_repvgg(p3)

    w1 = jnp.asarray(_pack_stride2_weight(np.asarray(K1), cin, cout, W), jnp.bfloat16)
    w2 = jnp.asarray(_pack_stride1_weight(np.asarray(K2), cout, Wo), jnp.bfloat16)
    w3 = jnp.asarray(_pack_stride1_weight(np.asarray(K3), cout, Wo), jnp.bfloat16)
    biases = jnp.asarray(
        np.stack([np.tile(np.asarray(B, np.float32), Wo) for B in (B1, B2, B3)]),
        jnp.float32)                                              # (3, Wo*cout)

    call = pl.pallas_call(
        _erblock_kernel,
        out_shape=jax.ShapeDtypeStruct((N, Ho, Lmid), jnp.float32),
        grid=(N,),
        in_specs=[
            pl.BlockSpec((1, Ho, Lin), lambda n: (n, 0, 0)),       # per-image input slab
            pl.BlockSpec((2, Lin, Lmid), lambda n: (0, 0, 0)),     # layer-1 packed weights
            pl.BlockSpec((3, Lmid, Lmid), lambda n: (0, 0, 0)),    # layer-2 packed weights
            pl.BlockSpec((3, Lmid, Lmid), lambda n: (0, 0, 0)),    # layer-3 packed weights
            pl.BlockSpec((3, Lmid), lambda n: (0, 0)),             # biases
        ],
        out_specs=pl.BlockSpec((1, Ho, Lmid), lambda n: (n, 0, 0)),
        compiler_params=pltpu.CompilerParams(
            dimension_semantics=("parallel",)),                    # v7x: one image per TC
    )

    @jax.jit
    def forward(x_nchw):
        # Minimal relayout: one transpose + free reshape + bf16 cast.
        # Row-pair packing: row j holds input rows (2j, 2j+1), lane = r*W*Cin + w*Cin + ci.
        x = jnp.transpose(x_nchw, (0, 2, 3, 1)).astype(jnp.bfloat16)   # NHWC
        xr = x.reshape(N, Ho, Lin)                                     # (N, H/2, 2*W*Cin)
        slab = call(xr, w1, w2, w3, biases)                            # (N, Ho, Wo*Cout) f32
        y = slab.reshape(N, Ho, Wo, cout)
        return jnp.transpose(y, (0, 3, 1, 2))                          # NCHW
    return forward


# ------------------------ pure-JAX reference (unfused) ----------------------- #
def _bn_eval(x_nchw, bn):
    g, b, m, v = bn
    inv = g / jnp.sqrt(v + EPS)
    return x_nchw * inv[None, :, None, None] + (b - m * inv)[None, :, None, None]


def _ref_repvgg(x, p):
    s = p['stride']
    dn = ('NCHW', 'OIHW', 'NCHW')
    y3 = jax.lax.conv_general_dilated(x, p['w3'], (s, s), ((1, 1), (1, 1)),
                                      dimension_numbers=dn,
                                      precision=jax.lax.Precision.HIGHEST)
    y3 = _bn_eval(y3 + p['b3'][None, :, None, None], p['bn3'])
    y1 = jax.lax.conv_general_dilated(x, p['w1'], (s, s), ((0, 0), (0, 0)),
                                      dimension_numbers=dn,
                                      precision=jax.lax.Precision.HIGHEST)
    y1 = _bn_eval(y1 + p['b1'][None, :, None, None], p['bn1'])
    y0 = _bn_eval(x, p['bn0']) if p['bn0'] is not None else 0.0
    t = y0 + y1 + y3
    return jnp.where(t >= 0, t, NEG_SLOPE * t)


def _ref_erblock(x, blocks):
    for p in blocks:
        x = _ref_repvgg(x, p)
    return x


# ----------------------------------- main ------------------------------------ #
if __name__ == "__main__":
    key = jax.random.PRNGKey(0)
    kx, kb1, kb2, kb3 = jax.random.split(key, 4)

    # ERBlock(in_channels=4, out_channels=8, number=2)
    N, Cin, H, W = 2, 4, 16, 16
    Cout = 8
    x = jax.random.normal(kx, (N, Cin, H, W), dtype=jnp.float32)

    blocks = (
        init_repvgg(kb1, Cin, Cout, stride=2),   # ERBlock.block1 (downsample)
        init_repvgg(kb2, Cout, Cout, stride=1),  # RepBlock.block1
        init_repvgg(kb3, Cout, Cout, stride=1),  # RepBlock.block_sequence[0]
    )

    forward = make_erblock_forward(blocks, N, H, W)   # fold/pack once (hoisted)
    out = forward(x)
    jax.block_until_ready(out)

    assert out.shape == (N, Cout, H // 2, W // 2), out.shape
    assert out.dtype == jnp.float32

    ref = _ref_erblock(x, blocks)                     # unfused eval-mode reference (f32)
    max_err = float(jnp.max(jnp.abs(out - ref)))
    # bf16 matmul operands (intentional, per perf review) with f32 accumulation.
    assert max_err < 5e-2, f"max abs error vs reference: {max_err}"

    print("KERNEL_OK")
</pallas_src>

<mosaic_0001>
module attributes {stable_mosaic.version = 11 : i64} {
  func.func @_erblock_kernel(%arg0: i32, %arg1: memref<1x8x128xbf16, #tpu.memory_space<vmem>>, %arg2: memref<2x128x64xbf16, #tpu.memory_space<vmem>>, %arg3: memref<3x64x64xbf16, #tpu.memory_space<vmem>>, %arg4: memref<3x64x64xbf16, #tpu.memory_space<vmem>>, %arg5: memref<3x64xf32, #tpu.memory_space<vmem>>, %arg6: memref<1x8x64xf32, #tpu.memory_space<vmem>>) attributes {dimension_semantics = [#tpu.dimension_semantics<parallel>], iteration_bounds = array<i64: 2>, scalar_prefetch = 0 : i64, scratch_operands = 0 : i64, tpu.core_type = #tpu.core_type<tc>, window_params = [{transform_indices = @transform_0, window_bounds = array<i64: 1, 8, 128>}, {pipeline_mode = #tpu.pipeline_mode<synchronous>, transform_indices = @transform_1, window_bounds = array<i64: 2, 128, 64>}, {pipeline_mode = #tpu.pipeline_mode<synchronous>, transform_indices = @transform_2, window_bounds = array<i64: 3, 64, 64>}, {pipeline_mode = #tpu.pipeline_mode<synchronous>, transform_indices = @transform_3, window_bounds = array<i64: 3, 64, 64>}, {pipeline_mode = #tpu.pipeline_mode<synchronous>, transform_indices = @transform_4, window_bounds = array<i64: 3, 64>}, {transform_indices = @transform_5, window_bounds = array<i64: 1, 8, 64>}]} {
    %c0 = arith.constant 0 : index
    %c0_0 = arith.constant 0 : index
    %0 = vector.load %arg5[%c0, %c0_0] : memref<3x64xf32, #tpu.memory_space<vmem>>, vector<3x64xf32>
    %c0_1 = arith.constant 0 : index
    %c0_2 = arith.constant 0 : index
    %c0_3 = arith.constant 0 : index
    %1 = vector.load %arg1[%c0_1, %c0_2, %c0_3] : memref<1x8x128xbf16, #tpu.memory_space<vmem>>, vector<1x8x128xbf16>
    %2 = vector.shape_cast %1 : vector<1x8x128xbf16> to vector<8x128xbf16>
    %c0_4 = arith.constant 0 : index
    %c0_5 = arith.constant 0 : index
    %c0_6 = arith.constant 0 : index
    %3 = vector.load %arg2[%c0_4, %c0_5, %c0_6] : memref<2x128x64xbf16, #tpu.memory_space<vmem>>, vector<1x128x64xbf16>
    %4 = vector.shape_cast %3 : vector<1x128x64xbf16> to vector<128x64xbf16>
    %cst = arith.constant dense<0.000000e+00> : vector<8x64xf32>
    %5 = tpu.matmul %2, %4, %cst {dimension_numbers = #tpu.dot_dimension_numbers<[1], [0], [0], [1], [0, 0, 1, 1], [], []>} : vector<8x128xbf16>, vector<128x64xbf16>, vector<8x64xf32> -> vector<8x64xf32>
    %c1 = arith.constant 1 : index
    %c0_7 = arith.constant 0 : index
    %c0_8 = arith.constant 0 : index
    %6 = vector.load %arg2[%c1, %c0_7, %c0_8] : memref<2x128x64xbf16, #tpu.memory_space<vmem>>, vector<1x128x64xbf16>
    %7 = vector.shape_cast %6 : vector<1x128x64xbf16> to vector<128x64xbf16>
    %cst_9 = arith.constant dense<0.000000e+00> : vector<8x64xf32>
    %8 = tpu.matmul %2, %7, %cst_9 {dimension_numbers = #tpu.dot_dimension_numbers<[1], [0], [0], [1], [0, 0, 1, 1], [], []>} : vector<8x128xbf16>, vector<128x64xbf16>, vector<8x64xf32> -> vector<8x64xf32>
    %cst_10 = arith.constant 0.000000e+00 : f32
    %9 = vector.broadcast %cst_10 : f32 to vector<1x64xf32>
    %10 = vector.extract_strided_slice %8 {offsets = [0, 0], sizes = [7, 64], strides = [1, 1]} : vector<8x64xf32> to vector<7x64xf32>
    %11 = tpu.concatenate %9, %10 in 0 : vector<1x64xf32>, vector<7x64xf32> -> vector<8x64xf32>
    %12 = arith.addf %5, %11 : vector<8x64xf32>
    %13 = vector.extract_strided_slice %0 {offsets = [0, 0], sizes = [1, 64], strides = [1, 1]} : vector<3x64xf32> to vector<1x64xf32>
    %14 = vector.broadcast %13 : vector<1x64xf32> to vector<8x64xf32>
    %15 = arith.addf %12, %14 : vector<8x64xf32>
    %cst_11 = arith.constant 0.000000e+00 : f32
    %16 = vector.broadcast %cst_11 : f32 to vector<8x64xf32>
    %17 = arith.cmpf oge, %15, %16 : vector<8x64xf32>
    %cst_12 = arith.constant 0.00999999977 : f32
    %18 = vector.broadcast %cst_12 : f32 to vector<8x64xf32>
    %19 = arith.mulf %18, %15 : vector<8x64xf32>
    %20 = arith.select %17, %15, %19 : vector<8x64xi1>, vector<8x64xf32>
    %21 = arith.truncf %20 : vector<8x64xf32> to vector<8x64xbf16>
    %c0_13 = arith.constant 0 : index
    %c0_14 = arith.constant 0 : index
    %c0_15 = arith.constant 0 : index
    %22 = vector.load %arg3[%c0_13, %c0_14, %c0_15] : memref<3x64x64xbf16, #tpu.memory_space<vmem>>, vector<1x64x64xbf16>
    %23 = vector.shape_cast %22 : vector<1x64x64xbf16> to vector<64x64xbf16>
    %cst_16 = arith.constant dense<0.000000e+00> : vector<8x64xf32>
    %24 = tpu.matmul %21, %23, %cst_16 {dimension_numbers = #tpu.dot_dimension_numbers<[1], [0], [0], [1], [0, 0, 1, 1], [], []>} : vector<8x64xbf16>, vector<64x64xbf16>, vector<8x64xf32> -> vector<8x64xf32>
    %c1_17 = arith.constant 1 : index
    %c0_18 = arith.constant 0 : index
    %c0_19 = arith.constant 0 : index
    %25 = vector.load %arg3[%c1_17, %c0_18, %c0_19] : memref<3x64x64xbf16, #tpu.memory_space<vmem>>, vector<1x64x64xbf16>
    %26 = vector.shape_cast %25 : vector<1x64x64xbf16> to vector<64x64xbf16>
    %cst_20 = arith.constant dense<0.000000e+00> : vector<8x64xf32>
    %27 = tpu.matmul %21, %26, %cst_20 {dimension_numbers = #tpu.dot_dimension_numbers<[1], [0], [0], [1], [0, 0, 1, 1], [], []>} : vector<8x64xbf16>, vector<64x64xbf16>, vector<8x64xf32> -> vector<8x64xf32>
    %c2 = arith.constant 2 : index
    %c0_21 = arith.constant 0 : index
    %c0_22 = arith.constant 0 : index
    %28 = vector.load %arg3[%c2, %c0_21, %c0_22] : memref<3x64x64xbf16, #tpu.memory_space<vmem>>, vector<1x64x64xbf16>
    %29 = vector.shape_cast %28 : vector<1x64x64xbf16> to vector<64x64xbf16>
    %cst_23 = arith.constant dense<0.000000e+00> : vector<8x64xf32>
    %30 = tpu.matmul %21, %29, %cst_23 {dimension_numbers = #tpu.dot_dimension_numbers<[1], [0], [0], [1], [0, 0, 1, 1], [], []>} : vector<8x64xbf16>, vector<64x64xbf16>, vector<8x64xf32> -> vector<8x64xf32>
    %cst_24 = arith.constant 0.000000e+00 : f32
    %31 = vector.broadcast %cst_24 : f32 to vector<1x64xf32>
    %32 = vector.extract_strided_slice %24 {offsets = [0, 0], sizes = [7, 64], strides = [1, 1]} : vector<8x64xf32> to vector<7x64xf32>
    %33 = tpu.concatenate %31, %32 in 0 : vector<1x64xf32>, vector<7x64xf32> -> vector<8x64xf32>
    %34 = arith.addf %27, %33 : vector<8x64xf32>
    %35 = vector.extract_strided_slice %30 {offsets = [1, 0], sizes = [7, 64], strides = [1, 1]} : vector<8x64xf32> to vector<7x64xf32>
    %cst_25 = arith.constant 0.000000e+00 : f32
    %36 = vector.broadcast %cst_25 : f32 to vector<1x64xf32>
    %37 = tpu.concatenate %35, %36 in 0 : vector<7x64xf32>, vector<1x64xf32> -> vector<8x64xf32>
    %38 = arith.addf %34, %37 : vector<8x64xf32>
    %39 = vector.extract_strided_slice %0 {offsets = [1, 0], sizes = [1, 64], strides = [1, 1]} : vector<3x64xf32> to vector<1x64xf32>
    %40 = vector.broadcast %39 : vector<1x64xf32> to vector<8x64xf32>
    %41 = arith.addf %38, %40 : vector<8x64xf32>
    %cst_26 = arith.constant 0.000000e+00 : f32
    %42 = vector.broadcast %cst_26 : f32 to vector<8x64xf32>
    %43 = arith.cmpf oge, %41, %42 : vector<8x64xf32>
    %cst_27 = arith.constant 0.00999999977 : f32
    %44 = vector.broadcast %cst_27 : f32 to vector<8x64xf32>
    %45 = arith.mulf %44, %41 : vector<8x64xf32>
    %46 = arith.select %43, %41, %45 : vector<8x64xi1>, vector<8x64xf32>
    %47 = arith.truncf %46 : vector<8x64xf32> to vector<8x64xbf16>
    %c0_28 = arith.constant 0 : index
    %c0_29 = arith.constant 0 : index
    %c0_30 = arith.constant 0 : index
    %48 = vector.load %arg4[%c0_28, %c0_29, %c0_30] : memref<3x64x64xbf16, #tpu.memory_space<vmem>>, vector<1x64x64xbf16>
    %49 = vector.shape_cast %48 : vector<1x64x64xbf16> to vector<64x64xbf16>
    %cst_31 = arith.constant dense<0.000000e+00> : vector<8x64xf32>
    %50 = tpu.matmul %47, %49, %cst_31 {dimension_numbers = #tpu.dot_dimension_numbers<[1], [0], [0], [1], [0, 0, 1, 1], [], []>} : vector<8x64xbf16>, vector<64x64xbf16>, vector<8x64xf32> -> vector<8x64xf32>
    %c1_32 = arith.constant 1 : index
    %c0_33 = arith.constant 0 : index
    %c0_34 = arith.constant 0 : index
    %51 = vector.load %arg4[%c1_32, %c0_33, %c0_34] : memref<3x64x64xbf16, #tpu.memory_space<vmem>>, vector<1x64x64xbf16>
    %52 = vector.shape_cast %51 : vector<1x64x64xbf16> to vector<64x64xbf16>
    %cst_35 = arith.constant dense<0.000000e+00> : vector<8x64xf32>
    %53 = tpu.matmul %47, %52, %cst_35 {dimension_numbers = #tpu.dot_dimension_numbers<[1], [0], [0], [1], [0, 0, 1, 1], [], []>} : vector<8x64xbf16>, vector<64x64xbf16>, vector<8x64xf32> -> vector<8x64xf32>
    %c2_36 = arith.constant 2 : index
    %c0_37 = arith.constant 0 : index
    %c0_38 = arith.constant 0 : index
    %54 = vector.load %arg4[%c2_36, %c0_37, %c0_38] : memref<3x64x64xbf16, #tpu.memory_space<vmem>>, vector<1x64x64xbf16>
    %55 = vector.shape_cast %54 : vector<1x64x64xbf16> to vector<64x64xbf16>
    %cst_39 = arith.constant dense<0.000000e+00> : vector<8x64xf32>
    %56 = tpu.matmul %47, %55, %cst_39 {dimension_numbers = #tpu.dot_dimension_numbers<[1], [0], [0], [1], [0, 0, 1, 1], [], []>} : vector<8x64xbf16>, vector<64x64xbf16>, vector<8x64xf32> -> vector<8x64xf32>
    %cst_40 = arith.constant 0.000000e+00 : f32
    %57 = vector.broadcast %cst_40 : f32 to vector<1x64xf32>
    %58 = vector.extract_strided_slice %50 {offsets = [0, 0], sizes = [7, 64], strides = [1, 1]} : vector<8x64xf32> to vector<7x64xf32>
    %59 = tpu.concatenate %57, %58 in 0 : vector<1x64xf32>, vector<7x64xf32> -> vector<8x64xf32>
    %60 = arith.addf %53, %59 : vector<8x64xf32>
    %61 = vector.extract_strided_slice %56 {offsets = [1, 0], sizes = [7, 64], strides = [1, 1]} : vector<8x64xf32> to vector<7x64xf32>
    %cst_41 = arith.constant 0.000000e+00 : f32
    %62 = vector.broadcast %cst_41 : f32 to vector<1x64xf32>
    %63 = tpu.concatenate %61, %62 in 0 : vector<7x64xf32>, vector<1x64xf32> -> vector<8x64xf32>
    %64 = arith.addf %60, %63 : vector<8x64xf32>
    %65 = vector.extract_strided_slice %0 {offsets = [2, 0], sizes = [1, 64], strides = [1, 1]} : vector<3x64xf32> to vector<1x64xf32>
    %66 = vector.broadcast %65 : vector<1x64xf32> to vector<8x64xf32>
    %67 = arith.addf %64, %66 : vector<8x64xf32>
    %cst_42 = arith.constant 0.000000e+00 : f32
    %68 = vector.broadcast %cst_42 : f32 to vector<8x64xf32>
    %69 = arith.cmpf oge, %67, %68 : vector<8x64xf32>
    %cst_43 = arith.constant 0.00999999977 : f32
    %70 = vector.broadcast %cst_43 : f32 to vector<8x64xf32>
    %71 = arith.mulf %70, %67 : vector<8x64xf32>
    %72 = arith.select %69, %67, %71 : vector<8x64xi1>, vector<8x64xf32>
    %c0_44 = arith.constant 0 : index
    %c0_45 = arith.constant 0 : index
    %c0_46 = arith.constant 0 : index
    %73 = vector.load %arg6[%c0_44, %c0_45, %c0_46] : memref<1x8x64xf32, #tpu.memory_space<vmem>>, vector<1x8x64xf32>
    %74 = vector.shape_cast %73 : vector<1x8x64xf32> to vector<8x64xf32>
    %75 = vector.shape_cast %72 : vector<8x64xf32> to vector<1x8x64xf32>
    tpu.vector_store %arg6[%c0_44, %c0_45, %c0_46], %75 {strides = array<i32>} : memref<1x8x64xf32, #tpu.memory_space<vmem>>, vector<1x8x64xf32>,
    return
  }
  func.func @transform_0(%arg0: i32) -> (i32, i32, i32) {
    %c0_i32 = arith.constant 0 : i32
    %c0_i32_0 = arith.constant 0 : i32
    %c0_i32_1 = arith.constant 0 : i32
    return %arg0, %c0_i32, %c0_i32_0 : i32, i32, i32
  }
  func.func @transform_1(%arg0: i32) -> (i32, i32, i32) {
    %c0_i32 = arith.constant 0 : i32
    %c0_i32_0 = arith.constant 0 : i32
    %c0_i32_1 = arith.constant 0 : i32
    %c0_i32_2 = arith.constant 0 : i32
    return %c0_i32, %c0_i32_0, %c0_i32_1 : i32, i32, i32
  }
  func.func @transform_2(%arg0: i32) -> (i32, i32, i32) {
    %c0_i32 = arith.constant 0 : i32
    %c0_i32_0 = arith.constant 0 : i32
    %c0_i32_1 = arith.constant 0 : i32
    %c0_i32_2 = arith.constant 0 : i32
    return %c0_i32, %c0_i32_0, %c0_i32_1 : i32, i32, i32
  }
  func.func @transform_3(%arg0: i32) -> (i32, i32, i32) {
    %c0_i32 = arith.constant 0 : i32
    %c0_i32_0 = arith.constant 0 : i32
    %c0_i32_1 = arith.constant 0 : i32
    %c0_i32_2 = arith.constant 0 : i32
    return %c0_i32, %c0_i32_0, %c0_i32_1 : i32, i32, i32
  }
  func.func @transform_4(%arg0: i32) -> (i32, i32) {
    %c0_i32 = arith.constant 0 : i32
    %c0_i32_0 = arith.constant 0 : i32
    %c0_i32_1 = arith.constant 0 : i32
    return %c0_i32, %c0_i32_0 : i32, i32
  }
  func.func @transform_5(%arg0: i32) -> (i32, i32, i32) {
    %c0_i32 = arith.constant 0 : i32
    %c0_i32_0 = arith.constant 0 : i32
    %c0_i32_1 = arith.constant 0 : i32
    return %arg0, %c0_i32, %c0_i32_0 : i32, i32, i32
  }
}

</mosaic_0001>

<llo_original>
// kernel: forward.1
$region0: #{forward.1}
  #allocation0 [shape = 'u32[]', space=smem, size = 0x4, offset = 0x4, fixed_abs, tag = 'smem constant byte address 0x4 - core index']
  #allocation1 [shape = 'u32[144,128]{1,0:T(1,128)}', space=vmem, size = 0x12000, scoped, tag = 'internal scratch']
  %s0 = inlined_call_operand.vmem [shape: bf16[2,8,128], index: 0, kind: input, shape index: {}]
  %s1 = inlined_call_operand.vmem [shape: bf16[2,128,64], index: 1, kind: input, shape index: {}]
  %s2 = inlined_call_operand.vmem [shape: bf16[3,64,64], index: 2, kind: input, shape index: {}]
  %s3 = inlined_call_operand.vmem [shape: bf16[3,64,64], index: 3, kind: input, shape index: {}]
  %s4 = inlined_call_operand.vmem [shape: f32[3,64], index: 4, kind: input, shape index: {}]
  %s5 = inlined_call_operand.vmem [shape: f32[2,8,64], index: 5, kind: output, shape index: {}]
  %s6 = sld [smem:[#allocation0]]
  $region53: #{forward.1} parent=0
    _
  %s8 = ssub.s32 1, %s6
  %s9 = scalar_select 0, %s8, %s6
  loop: start=0, step=1, limit=4
  $region2: #{forward.1} parent=0 // loop_pre_header
    _
  $region3: #{forward.1} parent=0 // loop_header
    %s11 = sphi 0, %s15
    %p12 = scmp.ge.s32.totalorder %s11, 4
    %s21 = sphi 0, %s23
    %s24 = sphi 0, %s21
    %s25 = sphi 0, %s24
    %s41 = sphi 0, %s25
    %s45 = sphi 0, %s45
    %s47 = sphi 0, %s45
    %s48 = sphi 0, %s47
    %s62 = sphi 0, %s48
    %s66 = sphi 0, %s66
    %s68 = sphi 0, %s66
    %s69 = sphi 0, %s68
    %s83 = sphi 0, %s69
    %s87 = sphi 0, %s87
    %s89 = sphi 0, %s87
    %s90 = sphi 0, %s89
    %s104 = sphi 0, %s90
    %s108 = sphi 0, %s108
    %s110 = sphi 0, %s108
    %s111 = sphi 0, %s110
    %s125 = sphi 0, %s111
    %s131 = sphi 0, %s133
    %s134 = sphi 0, %s131
    %s135 = sphi 0, %s134
    %s151 = sphi 0, %s135
  $region4: #{forward.1} parent=0 // loop_header_branch
    %14 = sbr.rel (%p12) target = $region8
  $region5: #{forward.1} parent=0 // loop_body
    %s16 = ssub.s32 %s11, 1
    %s17 = ssub.s32 %s11, 2
    %s18 = sadd.s32 %s11, 1
    %s19 = ssub.s32 %s11, %s18
    %p20 = scmp.eq.s32.totalorder %s19, 0
    %s22 = sadd.s32 %s21, 1
    %s23 = scalar_select %p20, %s21, %s22
    %p26 = pneg %p20
    %p27 = scmp.eq.s32.totalorder %s11, 1
    %p28 = por %p26, %p27
    %p29 = scmp.ne.s32.totalorder %s21, %s24
    %p30 = scmp.eq.s32.totalorder %s11, 0
    %p31 = por %p29, %p30
    %p32 = scmp.ne.s32.totalorder %s21, %s24
    %p33 = scmp.eq.s32.totalorder %s16, 1
    %p34 = por %p32, %p33
    %p35 = scmp.ne.s32.totalorder %s24, %s25
    %p36 = scmp.eq.s32.totalorder %s16, 0
    %p37 = por %p35, %p36
    %p38 = scmp.ne.s32.totalorder %s24, %s25
    %p39 = scmp.eq.s32.totalorder %s17, 1
    %p40 = por %p38, %p39
    %p42 = scmp.ne.s32.totalorder %s25, %s41
    %p43 = scmp.eq.s32.totalorder %s17, 0
    %p44 = por %p42, %p43
    %s46 = sadd.s32 %s45, 1
    %p49 = scmp.eq.s32.totalorder %s11, 1
    %p50 = scmp.ne.s32.totalorder %s45, %s47
    %p51 = scmp.eq.s32.totalorder %s11, 0
    %p52 = por %p50, %p51
    %p53 = scmp.ne.s32.totalorder %s45, %s47
    %p54 = scmp.eq.s32.totalorder %s16, 1
    %p55 = por %p53, %p54
    %p56 = scmp.ne.s32.totalorder %s47, %s48
    %p57 = scmp.eq.s32.totalorder %s16, 0
    %p58 = por %p56, %p57
    %p59 = scmp.ne.s32.totalorder %s47, %s48
    %p60 = scmp.eq.s32.totalorder %s17, 1
    %p61 = por %p59, %p60
    %p63 = scmp.ne.s32.totalorder %s48, %s62
    %p64 = scmp.eq.s32.totalorder %s17, 0
    %p65 = por %p63, %p64
    %s67 = sadd.s32 %s66, 1
    %p70 = scmp.eq.s32.totalorder %s11, 1
    %p71 = scmp.ne.s32.totalorder %s66, %s68
    %p72 = scmp.eq.s32.totalorder %s11, 0
    %p73 = por %p71, %p72
    %p74 = scmp.ne.s32.totalorder %s66, %s68
    %p75 = scmp.eq.s32.totalorder %s16, 1
    %p76 = por %p74, %p75
    %p77 = scmp.ne.s32.totalorder %s68, %s69
    %p78 = scmp.eq.s32.totalorder %s16, 0
    %p79 = por %p77, %p78
    %p80 = scmp.ne.s32.totalorder %s68, %s69
    %p81 = scmp.eq.s32.totalorder %s17, 1
    %p82 = por %p80, %p81
    %p84 = scmp.ne.s32.totalorder %s69, %s83
    %p85 = scmp.eq.s32.totalorder %s17, 0
    %p86 = por %p84, %p85
    %s88 = sadd.s32 %s87, 1
    %p91 = scmp.eq.s32.totalorder %s11, 1
    %p92 = scmp.ne.s32.totalorder %s87, %s89
    %p93 = scmp.eq.s32.totalorder %s11, 0
    %p94 = por %p92, %p93
    %p95 = scmp.ne.s32.totalorder %s87, %s89
    %p96 = scmp.eq.s32.totalorder %s16, 1
    %p97 = por %p95, %p96
    %p98 = scmp.ne.s32.totalorder %s89, %s90
    %p99 = scmp.eq.s32.totalorder %s16, 0
    %p100 = por %p98, %p99
    %p101 = scmp.ne.s32.totalorder %s89, %s90
    %p102 = scmp.eq.s32.totalorder %s17, 1
    %p103 = por %p101, %p102
    %p105 = scmp.ne.s32.totalorder %s90, %s104
    %p106 = scmp.eq.s32.totalorder %s17, 0
    %p107 = por %p105, %p106
    %s109 = sadd.s32 %s108, 1
    %p112 = scmp.eq.s32.totalorder %s11, 1
    %p113 = scmp.ne.s32.totalorder %s108, %s110
    %p114 = scmp.eq.s32.totalorder %s11, 0
    %p115 = por %p113, %p114
    %p116 = scmp.ne.s32.totalorder %s108, %s110
    %p117 = scmp.eq.s32.totalorder %s16, 1
    %p118 = por %p116, %p117
    %p119 = scmp.ne.s32.totalorder %s110, %s111
    %p120 = scmp.eq.s32.totalorder %s16, 0
    %p121 = por %p119, %p120
    %p122 = scmp.ne.s32.totalorder %s110, %s111
    %p123 = scmp.eq.s32.totalorder %s17, 1
    %p124 = por %p122, %p123
    %p126 = scmp.ne.s32.totalorder %s111, %s125
    %p127 = scmp.eq.s32.totalorder %s17, 0
    %p128 = por %p126, %p127
    %s129 = ssub.s32 %s11, %s18
    %p130 = scmp.eq.s32.totalorder %s129, 0
    %s132 = sadd.s32 %s131, 1
    %s133 = scalar_select %p130, %s131, %s132
    %p136 = pneg %p130
    %p137 = scmp.eq.s32.totalorder %s11, 1
    %p138 = por %p136, %p137
    %p139 = scmp.ne.s32.totalorder %s131, %s134
    %p140 = scmp.eq.s32.totalorder %s11, 0
    %p141 = por %p139, %p140
    %p142 = scmp.ne.s32.totalorder %s131, %s134
    %p143 = scmp.eq.s32.totalorder %s16, 1
    %p144 = por %p142, %p143
    %p145 = scmp.ne.s32.totalorder %s134, %s135
    %p146 = scmp.eq.s32.totalorder %s16, 0
    %p147 = por %p145, %p146
    %p148 = scmp.ne.s32.totalorder %s134, %s135
    %p149 = scmp.eq.s32.totalorder %s17, 1
    %p150 = por %p148, %p149
    %p152 = scmp.ne.s32.totalorder %s135, %s151
    %p153 = scmp.eq.s32.totalorder %s17, 0
    %p154 = por %p152, %p153
    %p155 = scmp.le.s32.totalorder 1, %s11
    %p156 = scmp.lt.s32.totalorder %s11, 3
    %p157 = pnand %p155, %p156
    %p158 = pneg %p157
    // Predicated region
    $region9: #{forward.1} parent=5 // pred_check
      _
    $region10: #{forward.1} parent=5 // pred_check_branch
      %160 = sbr.rel (%p157) target = $region12
    $region11: #{forward.1} parent=5 // pred_region
      %s161 = ssub.s32 %s11, 1
      // Predicated region
      $region13: #{forward.1} parent=11 // pred_check
        %p162 = pneg %p58
      $region14: #{forward.1} parent=11 // pred_check_branch
        %164 = sbr.rel (%p162) target = $region16
      $region15: #{forward.1} parent=11 // pred_region
        _
      $region16: #{forward.1} parent=11 // pred_fallthru
        _
      // Predicated region
      $region17: #{forward.1} parent=11 // pred_check
        %p165 = pneg %p79
      $region18: #{forward.1} parent=11 // pred_check_branch
        %167 = sbr.rel (%p165) target = $region20
      $region19: #{forward.1} parent=11 // pred_region
        _
      $region20: #{forward.1} parent=11 // pred_fallthru
        _
      // Predicated region
      $region21: #{forward.1} parent=11 // pred_check
        %p168 = pneg %p100
      $region22: #{forward.1} parent=11 // pred_check_branch
        %170 = sbr.rel (%p168) target = $region24
      $region23: #{forward.1} parent=11 // pred_region
        _
      $region24: #{forward.1} parent=11 // pred_fallthru
        _
      // Predicated region
      $region25: #{forward.1} parent=11 // pred_check
        %p171 = pneg %p121
      $region26: #{forward.1} parent=11 // pred_check_branch
        %173 = sbr.rel (%p171) target = $region28
      $region27: #{forward.1} parent=11 // pred_region
        _
      $region28: #{forward.1} parent=11 // pred_fallthru
        _
    $region12: #{forward.1} parent=5 // pred_fallthru
      _
    %p174 = scmp.lt.s32.totalorder %s11, 2
    // Predicated region
    $region29: #{forward.1} parent=5 // pred_check
      %p175 = pneg %p174
    $region30: #{forward.1} parent=5 // pred_check_branch
      %177 = sbr.rel (%p175) target = $region32
    $region31: #{forward.1} parent=5 // pred_region
      // Predicated region
      $region33: #{forward.1} parent=31 // pred_check
        %p178 = pneg %p31
      $region34: #{forward.1} parent=31 // pred_check_branch
        %180 = sbr.rel (%p178) target = $region36
      $region35: #{forward.1} parent=31 // pred_region
        %p181 = scmp.lt.s32.totalorder %s11, 1
        %s182 = scalar_select %p181, %s11, 1
        %s183 = smul.addr %s182, 4
        %s184 = scalar_lea.vmem %s0, %s183
      $region36: #{forward.1} parent=31 // pred_fallthru
        _
    $region32: #{forward.1} parent=5 // pred_fallthru
      _
    %p185 = scmp.le.s32.totalorder 1, %s11
    %p186 = scmp.lt.s32.totalorder %s11, 3
    %p187 = pnand %p185, %p186
    %p188 = pneg %p187
    // Predicated region
    $region37: #{forward.1} parent=5 // pred_check
      _
    $region38: #{forward.1} parent=5 // pred_check_branch
      %190 = sbr.rel (%p187) target = $region40
    $region39: #{forward.1} parent=5 // pred_region
      %s191 = ssub.s32 %s11, 1
      %p192 = scmp.lt.s32.totalorder %s16, 1
      %s193 = scalar_select %p192, %s16, 1
      %s194 = smul.addr %s193, 4
      %s195 = scalar_lea.vmem %s0, %s194
      %p196 = pneg %p37
      %p197 = pneg %p34
      %p198 = pneg %p58
      %p199 = pneg %p55
      %p200 = pneg %p79
      %p201 = pneg %p76
      %p202 = pneg %p100
      %p203 = pneg %p97
      %p204 = pneg %p121
      %p205 = pneg %p118
      %p206 = pneg %p147
      %p207 = pneg %p144
      %p208 = scmp.lt.s32.totalorder %s16, 1
      %s209 = scalar_select %p208, %s16, 1
      %s210 = smul.addr %s209, 8
      %s211 = scalar_lea.vmem %s5, %s210
      %p212 = scmp.lt.s32.totalorder %s16, 1
      %s213 = scalar_select %p212, %s16, 1
      %s214 = smul.addr %s213, 4
      %s215 = scalar_lea.vmem %s0, %s214
      %p216 = scmp.lt.s32.totalorder %s16, 1
      %s217 = scalar_select %p216, %s16, 1
      %s218 = smul.addr %s217, 8
      %s219 = scalar_lea.vmem %s5, %s218
      %v221 = vld [vmem:[%s4] sm:$0x7]
      %v222 = vld [vmem:[%s215] sm:$0xf]
      %v223 = vld [vmem:[%s1] sm:$0xf]
      %v224 = vld [vmem:[%s1 + $0x4] sm:$0xf]
      %v225 = vld [vmem:[%s1 + $0x8] sm:$0xf]
      %v226 = vld [vmem:[%s1 + $0xc] sm:$0xf]
      %v227 = vld [vmem:[%s1 + $0x10] sm:$0xf]
      %v228 = vld [vmem:[%s1 + $0x14] sm:$0xf]
      %v229 = vld [vmem:[%s1 + $0x18] sm:$0xf]
      %v230 = vld [vmem:[%s1 + $0x1c] sm:$0xf]
      %v231 = vld [vmem:[%s1 + $0x20] sm:$0xf]
      %v232 = vld [vmem:[%s1 + $0x24] sm:$0xf]
      %v233 = vld [vmem:[%s1 + $0x28] sm:$0xf]
      %v234 = vld [vmem:[%s1 + $0x2c] sm:$0xf]
      %v235 = vld [vmem:[%s1 + $0x30] sm:$0xf]
      %v236 = vld [vmem:[%s1 + $0x34] sm:$0xf]
      %v237 = vld [vmem:[%s1 + $0x38] sm:$0xf]
      %v238 = vld [vmem:[%s1 + $0x3c] sm:$0xf]
      %s239 = scalar_lea.vmem %s1, 64
      %v240 = vld [vmem:[%s239] sm:$0xf]
      %v241 = vld [vmem:[%s239 + $0x4] sm:$0xf]
      %v242 = vld [vmem:[%s239 + $0x8] sm:$0xf]
      %v243 = vld [vmem:[%s239 + $0xc] sm:$0xf]
      %v244 = vld [vmem:[%s239 + $0x10] sm:$0xf]
      %v245 = vld [vmem:[%s239 + $0x14] sm:$0xf]
      %v246 = vld [vmem:[%s239 + $0x18] sm:$0xf]
      %v247 = vld [vmem:[%s239 + $0x1c] sm:$0xf]
      %v248 = vld [vmem:[%s239 + $0x20] sm:$0xf]
      %v249 = vld [vmem:[%s239 + $0x24] sm:$0xf]
      %v250 = vld [vmem:[%s239 + $0x28] sm:$0xf]
      %v251 = vld [vmem:[%s239 + $0x2c] sm:$0xf]
      %v252 = vld [vmem:[%s239 + $0x30] sm:$0xf]
      %v253 = vld [vmem:[%s239 + $0x34] sm:$0xf]
      %v254 = vld [vmem:[%s239 + $0x38] sm:$0xf]
      %v255 = vld [vmem:[%s239 + $0x3c] sm:$0xf]
      %v272 = vunpack.c.l.b16 %v240
      %v273 = vunpack.c.l.b16 %v241
      %v274 = vunpack.c.l.b16 %v242
      %v275 = vunpack.c.l.b16 %v243
      %v276 = vunpack.c.l.b16 %v244
      %v277 = vunpack.c.l.b16 %v245
      %v278 = vunpack.c.l.b16 %v246
      %v279 = vunpack.c.l.b16 %v247
      %v280 = vunpack.c.l.b16 %v248
      %v281 = vunpack.c.l.b16 %v249
      %v282 = vunpack.c.l.b16 %v250
      %v283 = vunpack.c.l.b16 %v251
      %v284 = vunpack.c.l.b16 %v252
      %v285 = vunpack.c.l.b16 %v253
      %v286 = vunpack.c.l.b16 %v254
      %v287 = vunpack.c.l.b16 %v255
      %v288 = vpack.c.b16 %v273, %v272
      %v289 = vpack.c.b16 %v275, %v274
      %v290 = vpack.c.b16 %v277, %v276
      %v291 = vpack.c.b16 %v279, %v278
      %v292 = vpack.c.b16 %v281, %v280
      %v293 = vpack.c.b16 %v283, %v282
      %v294 = vpack.c.b16 %v285, %v284
      %v295 = vpack.c.b16 %v287, %v286
      %304 = vmatprep.subr.bf16.mxu0 0
      %305 = vmatpush1.bf16.msra.mxu0 %v288
      %306 = vmatprep.subr.bf16.mxu0 0
      %307 = vmatpush1.bf16.msra.mxu0 %v289
      %308 = vmatprep.subr.bf16.mxu0 0
      %309 = vmatpush1.bf16.msra.mxu0 %v290
      %310 = vmatprep.subr.bf16.mxu0 0
      %311 = vmatpush1.bf16.msra.mxu0 %v291
      %312 = vmatprep.subr.bf16.mxu0 0
      %313 = vmatpush1.bf16.msra.mxu0 %v292
      %314 = vmatprep.subr.bf16.mxu0 0
      %315 = vmatpush1.bf16.msra.mxu0 %v293
      %316 = vmatprep.subr.bf16.mxu0 0
      %317 = vmatpush1.bf16.msra.mxu0 %v294
      %318 = vmatprep.subr.bf16.mxu0 0
      %319 = vmatpush1.bf16.msra.mxu0 %v295
      %320 = vmatprep.subr.bf16.mxu0 0
      %321 = vmatpush1.bf16.msra.mxu0 0
      %322 = vmatprep.subr.bf16.mxu0 0
      %323 = vmatpush1.bf16.msra.mxu0 0
      %324 = vmatprep.subr.bf16.mxu0 0
      %325 = vmatpush1.bf16.msra.mxu0 0
      %326 = vmatprep.subr.bf16.mxu0 0
      %327 = vmatpush1.bf16.msra.mxu0 0
      %328 = vmatprep.subr.bf16.mxu0 0
      %329 = vmatpush1.bf16.msra.mxu0 0
      %330 = vmatprep.subr.bf16.mxu0 0
      %331 = vmatpush1.bf16.msra.mxu0 0
      %332 = vmatprep.subr.bf16.mxu0 0
      %333 = vmatpush1.bf16.msra.mxu0 0
      %334 = vmatprep.subr.bf16.mxu0 0
      %335 = vmatpush1.bf16.msra.mxu0 0
      %336 = vmatprep.mubr.bf16.mxu0 0
      %337 = vmatmul.mubr.bf16.gmra.mrb[0].mxu0 %v222
      %v338 = vpop.f32.mrb[0].mxu0
      %v339 = vadd.f32 0.0, %v338
      %v340 = vpop.f32.mrb[0].mxu0
      %v341 = vpop.f32.mrb[0].mxu0
      %v342 = vpop.f32.mrb[0].mxu0
      %343 = vdwg.mxu0
      %v345 = vrot.slane %v339, 7
      %vm347 = vcmask 1040384
      %v348 = vsel %vm347, 0.0, %v345
      %v365 = vunpack.c.l.b16 %v223
      %v366 = vunpack.c.l.b16 %v224
      %v367 = vunpack.c.l.b16 %v225
      %v368 = vunpack.c.l.b16 %v226
      %v369 = vunpack.c.l.b16 %v227
      %v370 = vunpack.c.l.b16 %v228
      %v371 = vunpack.c.l.b16 %v229
      %v372 = vunpack.c.l.b16 %v230
      %v373 = vunpack.c.l.b16 %v231
      %v374 = vunpack.c.l.b16 %v232
      %v375 = vunpack.c.l.b16 %v233
      %v376 = vunpack.c.l.b16 %v234
      %v377 = vunpack.c.l.b16 %v235
      %v378 = vunpack.c.l.b16 %v236
      %v379 = vunpack.c.l.b16 %v237
      %v380 = vunpack.c.l.b16 %v238
      %v381 = vpack.c.b16 %v366, %v365
      %v382 = vpack.c.b16 %v368, %v367
      %v383 = vpack.c.b16 %v370, %v369
      %v384 = vpack.c.b16 %v372, %v371
      %v385 = vpack.c.b16 %v374, %v373
      %v386 = vpack.c.b16 %v376, %v375
      %v387 = vpack.c.b16 %v378, %v377
      %v388 = vpack.c.b16 %v380, %v379
      %397 = vmatprep.subr.bf16.mxu0 0
      %398 = vmatpush1.bf16.msra.mxu0 %v381
      %399 = vmatprep.subr.bf16.mxu0 0
      %400 = vmatpush1.bf16.msra.mxu0 %v382
      %401 = vmatprep.subr.bf16.mxu0 0
      %402 = vmatpush1.bf16.msra.mxu0 %v383
      %403 = vmatprep.subr.bf16.mxu0 0
      %404 = vmatpush1.bf16.msra.mxu0 %v384
      %405 = vmatprep.subr.bf16.mxu0 0
      %406 = vmatpush1.bf16.msra.mxu0 %v385
      %407 = vmatprep.subr.bf16.mxu0 0
      %408 = vmatpush1.bf16.msra.mxu0 %v386
      %409 = vmatprep.subr.bf16.mxu0 0
      %410 = vmatpush1.bf16.msra.mxu0 %v387
      %411 = vmatprep.subr.bf16.mxu0 0
      %412 = vmatpush1.bf16.msra.mxu0 %v388
      %413 = vmatprep.subr.bf16.mxu0 0
      %414 = vmatpush1.bf16.msra.mxu0 0
      %415 = vmatprep.subr.bf16.mxu0 0
      %416 = vmatpush1.bf16.msra.mxu0 0
      %417 = vmatprep.subr.bf16.mxu0 0
      %418 = vmatpush1.bf16.msra.mxu0 0
      %419 = vmatprep.subr.bf16.mxu0 0
      %420 = vmatpush1.bf16.msra.mxu0 0
      %421 = vmatprep.subr.bf16.mxu0 0
      %422 = vmatpush1.bf16.msra.mxu0 0
      %423 = vmatprep.subr.bf16.mxu0 0
      %424 = vmatpush1.bf16.msra.mxu0 0
      %425 = vmatprep.subr.bf16.mxu0 0
      %426 = vmatpush1.bf16.msra.mxu0 0
      %427 = vmatprep.subr.bf16.mxu0 0
      %428 = vmatpush1.bf16.msra.mxu0 0
      %429 = vmatprep.mubr.bf16.mxu0 0
      %430 = vmatmul.mubr.bf16.gmra.mrb[0].mxu0 %v222
      %v431 = vpop.f32.mrb[0].mxu0
      %v432 = vadd.f32 %v348, %v431
      %v433 = vpop.f32.mrb[0].mxu0
      %v434 = vpop.f32.mrb[0].mxu0
      %v435 = vpop.f32.mrb[0].mxu0
      %436 = vdwg.mxu0
      %v437 = vlaneseq
      %v438 = vshrl.u32 %v437, 7
      %v439 = vsub.s32 0, %v438
      %v440 = vrot.slane %v221, %v439
      %v441 = vadd.f32 %v432, %v440
      %vm442 = vcmp.ge.f32.partialorder %v441, 0.0
      %v443 = vmul.f32 %v441, 0.01
      %v444 = vsel %vm442, %v441, %v443
      %v445 = vpack.c.bf16 %v444, %v444
      %v446 = vld [vmem:[%s2] sm:$0xf]
      %v447 = vld [vmem:[%s2 + $0x4] sm:$0xf]
      %v448 = vld [vmem:[%s2 + $0x8] sm:$0xf]
      %v449 = vld [vmem:[%s2 + $0xc] sm:$0xf]
      %v450 = vld [vmem:[%s2 + $0x10] sm:$0xf]
      %v451 = vld [vmem:[%s2 + $0x14] sm:$0xf]
      %v452 = vld [vmem:[%s2 + $0x18] sm:$0xf]
      %v453 = vld [vmem:[%s2 + $0x1c] sm:$0xf]
      %v462 = vunpack.c.l.b16 %v446
      %v463 = vunpack.c.l.b16 %v447
      %v464 = vunpack.c.l.b16 %v448
      %v465 = vunpack.c.l.b16 %v449
      %v466 = vunpack.c.l.b16 %v450
      %v467 = vunpack.c.l.b16 %v451
      %v468 = vunpack.c.l.b16 %v452
      %v469 = vunpack.c.l.b16 %v453
      %v470 = vpack.c.b16 %v463, %v462
      %v471 = vpack.c.b16 %v465, %v464
      %v472 = vpack.c.b16 %v467, %v466
      %v473 = vpack.c.b16 %v469, %v468
      %vm478 = vcmask 523264
      %v480 = vsel %vm478, %v445, 0
      %482 = vmatprep.subr.bf16.mxu0 0
      %483 = vmatpush1.bf16.msra.mxu0 %v470
      %484 = vmatprep.subr.bf16.mxu0 0
      %485 = vmatpush1.bf16.msra.mxu0 %v471
      %486 = vmatprep.subr.bf16.mxu0 0
      %487 = vmatpush1.bf16.msra.mxu0 %v472
      %488 = vmatprep.subr.bf16.mxu0 0
      %489 = vmatpush1.bf16.msra.mxu0 %v473
      %490 = vmatprep.subr.bf16.mxu0 0
      %491 = vmatpush1.bf16.msra.mxu0 0
      %492 = vmatprep.subr.bf16.mxu0 0
      %493 = vmatpush1.bf16.msra.mxu0 0
      %494 = vmatprep.subr.bf16.mxu0 0
      %495 = vmatpush1.bf16.msra.mxu0 0
      %496 = vmatprep.subr.bf16.mxu0 0
      %497 = vmatpush1.bf16.msra.mxu0 0
      %498 = vmatprep.subr.bf16.mxu0 0
      %499 = vmatpush1.bf16.msra.mxu0 0
      %500 = vmatprep.subr.bf16.mxu0 0
      %501 = vmatpush1.bf16.msra.mxu0 0
      %502 = vmatprep.subr.bf16.mxu0 0
      %503 = vmatpush1.bf16.msra.mxu0 0
      %504 = vmatprep.subr.bf16.mxu0 0
      %505 = vmatpush1.bf16.msra.mxu0 0
      %506 = vmatprep.subr.bf16.mxu0 0
      %507 = vmatpush1.bf16.msra.mxu0 0
      %508 = vmatprep.subr.bf16.mxu0 0
      %509 = vmatpush1.bf16.msra.mxu0 0
      %510 = vmatprep.subr.bf16.mxu0 0
      %511 = vmatpush1.bf16.msra.mxu0 0
      %512 = vmatprep.subr.bf16.mxu0 0
      %513 = vmatpush1.bf16.msra.mxu0 0
      %514 = vmatprep.mubr.bf16.mxu0 0
      %515 = vmatmul.mubr.bf16.gmra.mrb[0].mxu0 %v480
      %v516 = vpop.f32.mrb[0].mxu0
      %v517 = vadd.f32 0.0, %v516
      %v518 = vpop.f32.mrb[0].mxu0
      %v519 = vpop.f32.mrb[0].mxu0
      %v520 = vpop.f32.mrb[0].mxu0
      %521 = vdwg.mxu0
      %s522 = scalar_lea.vmem %s2, 32
      %v523 = vld [vmem:[%s522] sm:$0xf]
      %v524 = vld [vmem:[%s522 + $0x4] sm:$0xf]
      %v525 = vld [vmem:[%s522 + $0x8] sm:$0xf]
      %v526 = vld [vmem:[%s522 + $0xc] sm:$0xf]
      %v527 = vld [vmem:[%s522 + $0x10] sm:$0xf]
      %v528 = vld [vmem:[%s522 + $0x14] sm:$0xf]
      %v529 = vld [vmem:[%s522 + $0x18] sm:$0xf]
      %v530 = vld [vmem:[%s522 + $0x1c] sm:$0xf]
      %s531 = scalar_lea.vmem %s2, 64
      %v532 = vld [vmem:[%s531] sm:$0xf]
      %v533 = vld [vmem:[%s531 + $0x4] sm:$0xf]
      %v534 = vld [vmem:[%s531 + $0x8] sm:$0xf]
      %v535 = vld [vmem:[%s531 + $0xc] sm:$0xf]
      %v536 = vld [vmem:[%s531 + $0x10] sm:$0xf]
      %v537 = vld [vmem:[%s531 + $0x14] sm:$0xf]
      %v538 = vld [vmem:[%s531 + $0x18] sm:$0xf]
      %v539 = vld [vmem:[%s531 + $0x1c] sm:$0xf]
      %v548 = vunpack.c.l.b16 %v532
      %v549 = vunpack.c.l.b16 %v533
      %v550 = vunpack.c.l.b16 %v534
      %v551 = vunpack.c.l.b16 %v535
      %v552 = vunpack.c.l.b16 %v536
      %v553 = vunpack.c.l.b16 %v537
      %v554 = vunpack.c.l.b16 %v538
      %v555 = vunpack.c.l.b16 %v539
      %v556 = vpack.c.b16 %v549, %v548
      %v557 = vpack.c.b16 %v551, %v550
      %v558 = vpack.c.b16 %v553, %v552
      %v559 = vpack.c.b16 %v555, %v554
      %564 = vmatprep.subr.bf16.mxu0 0
      %565 = vmatpush1.bf16.msra.mxu0 %v556
      %566 = vmatprep.subr.bf16.mxu0 0
      %567 = vmatpush1.bf16.msra.mxu0 %v557
      %568 = vmatprep.subr.bf16.mxu0 0
      %569 = vmatpush1.bf16.msra.mxu0 %v558
      %570 = vmatprep.subr.bf16.mxu0 0
      %571 = vmatpush1.bf16.msra.mxu0 %v559
      %572 = vmatprep.subr.bf16.mxu0 0
      %573 = vmatpush1.bf16.msra.mxu0 0
      %574 = vmatprep.subr.bf16.mxu0 0
      %575 = vmatpush1.bf16.msra.mxu0 0
      %576 = vmatprep.subr.bf16.mxu0 0
      %577 = vmatpush1.bf16.msra.mxu0 0
      %578 = vmatprep.subr.bf16.mxu0 0
      %579 = vmatpush1.bf16.msra.mxu0 0
      %580 = vmatprep.subr.bf16.mxu0 0
      %581 = vmatpush1.bf16.msra.mxu0 0
      %582 = vmatprep.subr.bf16.mxu0 0
      %583 = vmatpush1.bf16.msra.mxu0 0
      %584 = vmatprep.subr.bf16.mxu0 0
      %585 = vmatpush1.bf16.msra.mxu0 0
      %586 = vmatprep.subr.bf16.mxu0 0
      %587 = vmatpush1.bf16.msra.mxu0 0
      %588 = vmatprep.subr.bf16.mxu0 0
      %589 = vmatpush1.bf16.msra.mxu0 0
      %590 = vmatprep.subr.bf16.mxu0 0
      %591 = vmatpush1.bf16.msra.mxu0 0
      %592 = vmatprep.subr.bf16.mxu0 0
      %593 = vmatpush1.bf16.msra.mxu0 0
      %594 = vmatprep.subr.bf16.mxu0 0
      %595 = vmatpush1.bf16.msra.mxu0 0
      %596 = vmatprep.mubr.bf16.mxu0 0
      %597 = vmatmul.mubr.bf16.gmra.mrb[0].mxu0 %v480
      %v598 = vpop.f32.mrb[0].mxu0
      %v599 = vadd.f32 0.0, %v598
      %v600 = vpop.f32.mrb[0].mxu0
      %v601 = vpop.f32.mrb[0].mxu0
      %v602 = vpop.f32.mrb[0].mxu0
      %603 = vdwg.mxu0
      %v605 = vrot.slane %v517, 7
      %v607 = vsel %vm347, 0.0, %v605
      %v616 = vunpack.c.l.b16 %v523
      %v617 = vunpack.c.l.b16 %v524
      %v618 = vunpack.c.l.b16 %v525
      %v619 = vunpack.c.l.b16 %v526
      %v620 = vunpack.c.l.b16 %v527
      %v621 = vunpack.c.l.b16 %v528
      %v622 = vunpack.c.l.b16 %v529
      %v623 = vunpack.c.l.b16 %v530
      %v624 = vpack.c.b16 %v617, %v616
      %v625 = vpack.c.b16 %v619, %v618
      %v626 = vpack.c.b16 %v621, %v620
      %v627 = vpack.c.b16 %v623, %v622
      %632 = vmatprep.subr.bf16.mxu0 0
      %633 = vmatpush1.bf16.msra.mxu0 %v624
      %634 = vmatprep.subr.bf16.mxu0 0
      %635 = vmatpush1.bf16.msra.mxu0 %v625
      %636 = vmatprep.subr.bf16.mxu0 0
      %637 = vmatpush1.bf16.msra.mxu0 %v626
      %638 = vmatprep.subr.bf16.mxu0 0
      %639 = vmatpush1.bf16.msra.mxu0 %v627
      %640 = vmatprep.subr.bf16.mxu0 0
      %641 = vmatpush1.bf16.msra.mxu0 0
      %642 = vmatprep.subr.bf16.mxu0 0
      %643 = vmatpush1.bf16.msra.mxu0 0
      %644 = vmatprep.subr.bf16.mxu0 0
      %645 = vmatpush1.bf16.msra.mxu0 0
      %646 = vmatprep.subr.bf16.mxu0 0
      %647 = vmatpush1.bf16.msra.mxu0 0
      %648 = vmatprep.subr.bf16.mxu0 0
      %649 = vmatpush1.bf16.msra.mxu0 0
      %650 = vmatprep.subr.bf16.mxu0 0
      %651 = vmatpush1.bf16.msra.mxu0 0
      %652 = vmatprep.subr.bf16.mxu0 0
      %653 = vmatpush1.bf16.msra.mxu0 0
      %654 = vmatprep.subr.bf16.mxu0 0
      %655 = vmatpush1.bf16.msra.mxu0 0
      %656 = vmatprep.subr.bf16.mxu0 0
      %657 = vmatpush1.bf16.msra.mxu0 0
      %658 = vmatprep.subr.bf16.mxu0 0
      %659 = vmatpush1.bf16.msra.mxu0 0
      %660 = vmatprep.subr.bf16.mxu0 0
      %661 = vmatpush1.bf16.msra.mxu0 0
      %662 = vmatprep.subr.bf16.mxu0 0
      %663 = vmatpush1.bf16.msra.mxu0 0
      %664 = vmatprep.mubr.bf16.mxu0 0
      %665 = vmatmul.mubr.bf16.gmra.mrb[0].mxu0 %v480
      %v666 = vpop.f32.mrb[0].mxu0
      %v667 = vadd.f32 %v607, %v666
      %v668 = vpop.f32.mrb[0].mxu0
      %v669 = vpop.f32.mrb[0].mxu0
      %v670 = vpop.f32.mrb[0].mxu0
      %671 = vdwg.mxu0
      %v673 = vrot.slane %v599, 1
      %vm675 = vcmask 1046528
      %v676 = vsel %vm675, %v673, 0.0
      %v677 = vadd.f32 %v667, %v676
      %v678 = vlaneseq
      %v679 = vshrl.u32 %v678, 7
      %v680 = vsub.s32 1, %v679
      %v681 = vrot.slane %v221, %v680
      %v682 = vadd.f32 %v677, %v681
      %vm683 = vcmp.ge.f32.partialorder %v682, 0.0
      %v684 = vmul.f32 %v682, 0.01
      %v685 = vsel %vm683, %v682, %v684
      %v686 = vpack.c.bf16 %v685, %v685
      %v687 = vld [vmem:[%s3] sm:$0xf]
      %v688 = vld [vmem:[%s3 + $0x4] sm:$0xf]
      %v689 = vld [vmem:[%s3 + $0x8] sm:$0xf]
      %v690 = vld [vmem:[%s3 + $0xc] sm:$0xf]
      %v691 = vld [vmem:[%s3 + $0x10] sm:$0xf]
      %v692 = vld [vmem:[%s3 + $0x14] sm:$0xf]
      %v693 = vld [vmem:[%s3 + $0x18] sm:$0xf]
      %v694 = vld [vmem:[%s3 + $0x1c] sm:$0xf]
      %v703 = vunpack.c.l.b16 %v687
      %v704 = vunpack.c.l.b16 %v688
      %v705 = vunpack.c.l.b16 %v689
      %v706 = vunpack.c.l.b16 %v690
      %v707 = vunpack.c.l.b16 %v691
      %v708 = vunpack.c.l.b16 %v692
      %v709 = vunpack.c.l.b16 %v693
      %v710 = vunpack.c.l.b16 %v694
      %v711 = vpack.c.b16 %v704, %v703
      %v712 = vpack.c.b16 %v706, %v705
      %v713 = vpack.c.b16 %v708, %v707
      %v714 = vpack.c.b16 %v710, %v709
      %v720 = vsel %vm478, %v686, 0
      %722 = vmatprep.subr.bf16.mxu0 0
      %723 = vmatpush1.bf16.msra.mxu0 %v711
      %724 = vmatprep.subr.bf16.mxu0 0
      %725 = vmatpush1.bf16.msra.mxu0 %v712
      %726 = vmatprep.subr.bf16.mxu0 0
      %727 = vmatpush1.bf16.msra.mxu0 %v713
      %728 = vmatprep.subr.bf16.mxu0 0
      %729 = vmatpush1.bf16.msra.mxu0 %v714
      %730 = vmatprep.subr.bf16.mxu0 0
      %731 = vmatpush1.bf16.msra.mxu0 0
      %732 = vmatprep.subr.bf16.mxu0 0
      %733 = vmatpush1.bf16.msra.mxu0 0
      %734 = vmatprep.subr.bf16.mxu0 0
      %735 = vmatpush1.bf16.msra.mxu0 0
      %736 = vmatprep.subr.bf16.mxu0 0
      %737 = vmatpush1.bf16.msra.mxu0 0
      %738 = vmatprep.subr.bf16.mxu0 0
      %739 = vmatpush1.bf16.msra.mxu0 0
      %740 = vmatprep.subr.bf16.mxu0 0
      %741 = vmatpush1.bf16.msra.mxu0 0
      %742 = vmatprep.subr.bf16.mxu0 0
      %743 = vmatpush1.bf16.msra.mxu0 0
      %744 = vmatprep.subr.bf16.mxu0 0
      %745 = vmatpush1.bf16.msra.mxu0 0
      %746 = vmatprep.subr.bf16.mxu0 0
      %747 = vmatpush1.bf16.msra.mxu0 0
      %748 = vmatprep.subr.bf16.mxu0 0
      %749 = vmatpush1.bf16.msra.mxu0 0
      %750 = vmatprep.subr.bf16.mxu0 0
      %751 = vmatpush1.bf16.msra.mxu0 0
      %752 = vmatprep.subr.bf16.mxu0 0
      %753 = vmatpush1.bf16.msra.mxu0 0
      %754 = vmatprep.mubr.bf16.mxu0 0
      %755 = vmatmul.mubr.bf16.gmra.mrb[0].mxu0 %v720
      %v756 = vpop.f32.mrb[0].mxu0
      %v757 = vadd.f32 0.0, %v756
      %v758 = vpop.f32.mrb[0].mxu0
      %v759 = vpop.f32.mrb[0].mxu0
      %v760 = vpop.f32.mrb[0].mxu0
      %761 = vdwg.mxu0
      %s762 = scalar_lea.vmem %s3, 32
      %v763 = vld [vmem:[%s762] sm:$0xf]
      %v764 = vld [vmem:[%s762 + $0x4] sm:$0xf]
      %v765 = vld [vmem:[%s762 + $0x8] sm:$0xf]
      %v766 = vld [vmem:[%s762 + $0xc] sm:$0xf]
      %v767 = vld [vmem:[%s762 + $0x10] sm:$0xf]
      %v768 = vld [vmem:[%s762 + $0x14] sm:$0xf]
      %v769 = vld [vmem:[%s762 + $0x18] sm:$0xf]
      %v770 = vld [vmem:[%s762 + $0x1c] sm:$0xf]
      %s771 = scalar_lea.vmem %s3, 64
      %v772 = vld [vmem:[%s771] sm:$0xf]
      %v773 = vld [vmem:[%s771 + $0x4] sm:$0xf]
      %v774 = vld [vmem:[%s771 + $0x8] sm:$0xf]
      %v775 = vld [vmem:[%s771 + $0xc] sm:$0xf]
      %v776 = vld [vmem:[%s771 + $0x10] sm:$0xf]
      %v777 = vld [vmem:[%s771 + $0x14] sm:$0xf]
      %v778 = vld [vmem:[%s771 + $0x18] sm:$0xf]
      %v779 = vld [vmem:[%s771 + $0x1c] sm:$0xf]
      %v788 = vunpack.c.l.b16 %v772
      %v789 = vunpack.c.l.b16 %v773
      %v790 = vunpack.c.l.b16 %v774
      %v791 = vunpack.c.l.b16 %v775
      %v792 = vunpack.c.l.b16 %v776
      %v793 = vunpack.c.l.b16 %v777
      %v794 = vunpack.c.l.b16 %v778
      %v795 = vunpack.c.l.b16 %v779
      %v796 = vpack.c.b16 %v789, %v788
      %v797 = vpack.c.b16 %v791, %v790
      %v798 = vpack.c.b16 %v793, %v792
      %v799 = vpack.c.b16 %v795, %v794
      %804 = vmatprep.subr.bf16.mxu0 0
      %805 = vmatpush1.bf16.msra.mxu0 %v796
      %806 = vmatprep.subr.bf16.mxu0 0
      %807 = vmatpush1.bf16.msra.mxu0 %v797
      %808 = vmatprep.subr.bf16.mxu0 0
      %809 = vmatpush1.bf16.msra.mxu0 %v798
      %810 = vmatprep.subr.bf16.mxu0 0
      %811 = vmatpush1.bf16.msra.mxu0 %v799
      %812 = vmatprep.subr.bf16.mxu0 0
      %813 = vmatpush1.bf16.msra.mxu0 0
      %814 = vmatprep.subr.bf16.mxu0 0
      %815 = vmatpush1.bf16.msra.mxu0 0
      %816 = vmatprep.subr.bf16.mxu0 0
      %817 = vmatpush1.bf16.msra.mxu0 0
      %818 = vmatprep.subr.bf16.mxu0 0
      %819 = vmatpush1.bf16.msra.mxu0 0
      %820 = vmatprep.subr.bf16.mxu0 0
      %821 = vmatpush1.bf16.msra.mxu0 0
      %822 = vmatprep.subr.bf16.mxu0 0
      %823 = vmatpush1.bf16.msra.mxu0 0
      %824 = vmatprep.subr.bf16.mxu0 0
      %825 = vmatpush1.bf16.msra.mxu0 0
      %826 = vmatprep.subr.bf16.mxu0 0
      %827 = vmatpush1.bf16.msra.mxu0 0
      %828 = vmatprep.subr.bf16.mxu0 0
      %829 = vmatpush1.bf16.msra.mxu0 0
      %830 = vmatprep.subr.bf16.mxu0 0
      %831 = vmatpush1.bf16.msra.mxu0 0
      %832 = vmatprep.subr.bf16.mxu0 0
      %833 = vmatpush1.bf16.msra.mxu0 0
      %834 = vmatprep.subr.bf16.mxu0 0
      %835 = vmatpush1.bf16.msra.mxu0 0
      %836 = vmatprep.mubr.bf16.mxu0 0
      %837 = vmatmul.mubr.bf16.gmra.mrb[0].mxu0 %v720
      %v838 = vpop.f32.mrb[0].mxu0
      %v839 = vadd.f32 0.0, %v838
      %v840 = vpop.f32.mrb[0].mxu0
      %v841 = vpop.f32.mrb[0].mxu0
      %v842 = vpop.f32.mrb[0].mxu0
      %843 = vdwg.mxu0
      %v845 = vrot.slane %v757, 7
      %v847 = vsel %vm347, 0.0, %v845
      %v856 = vunpack.c.l.b16 %v763
      %v857 = vunpack.c.l.b16 %v764
      %v858 = vunpack.c.l.b16 %v765
      %v859 = vunpack.c.l.b16 %v766
      %v860 = vunpack.c.l.b16 %v767
      %v861 = vunpack.c.l.b16 %v768
      %v862 = vunpack.c.l.b16 %v769
      %v863 = vunpack.c.l.b16 %v770
      %v864 = vpack.c.b16 %v857, %v856
      %v865 = vpack.c.b16 %v859, %v858
      %v866 = vpack.c.b16 %v861, %v860
      %v867 = vpack.c.b16 %v863, %v862
      %872 = vmatprep.subr.bf16.mxu0 0
      %873 = vmatpush1.bf16.msra.mxu0 %v864
      %874 = vmatprep.subr.bf16.mxu0 0
      %875 = vmatpush1.bf16.msra.mxu0 %v865
      %876 = vmatprep.subr.bf16.mxu0 0
      %877 = vmatpush1.bf16.msra.mxu0 %v866
      %878 = vmatprep.subr.bf16.mxu0 0
      %879 = vmatpush1.bf16.msra.mxu0 %v867
      %880 = vmatprep.subr.bf16.mxu0 0
      %881 = vmatpush1.bf16.msra.mxu0 0
      %882 = vmatprep.subr.bf16.mxu0 0
      %883 = vmatpush1.bf16.msra.mxu0 0
      %884 = vmatprep.subr.bf16.mxu0 0
      %885 = vmatpush1.bf16.msra.mxu0 0
      %886 = vmatprep.subr.bf16.mxu0 0
      %887 = vmatpush1.bf16.msra.mxu0 0
      %888 = vmatprep.subr.bf16.mxu0 0
      %889 = vmatpush1.bf16.msra.mxu0 0
      %890 = vmatprep.subr.bf16.mxu0 0
      %891 = vmatpush1.bf16.msra.mxu0 0
      %892 = vmatprep.subr.bf16.mxu0 0
      %893 = vmatpush1.bf16.msra.mxu0 0
      %894 = vmatprep.subr.bf16.mxu0 0
      %895 = vmatpush1.bf16.msra.mxu0 0
      %896 = vmatprep.subr.bf16.mxu0 0
      %897 = vmatpush1.bf16.msra.mxu0 0
      %898 = vmatprep.subr.bf16.mxu0 0
      %899 = vmatpush1.bf16.msra.mxu0 0
      %900 = vmatprep.subr.bf16.mxu0 0
      %901 = vmatpush1.bf16.msra.mxu0 0
      %902 = vmatprep.subr.bf16.mxu0 0
      %903 = vmatpush1.bf16.msra.mxu0 0
      %904 = vmatprep.mubr.bf16.mxu0 0
      %905 = vmatmul.mubr.bf16.gmra.mrb[0].mxu0 %v720
      %v906 = vpop.f32.mrb[0].mxu0
      %v907 = vadd.f32 %v847, %v906
      %v908 = vpop.f32.mrb[0].mxu0
      %v909 = vpop.f32.mrb[0].mxu0
      %v910 = vpop.f32.mrb[0].mxu0
      %911 = vdwg.mxu0
      %v913 = vrot.slane %v839, 1
      %v915 = vsel %vm675, %v913, 0.0
      %v916 = vadd.f32 %v907, %v915
      %v917 = vlaneseq
      %v918 = vshrl.u32 %v917, 7
      %v919 = vsub.s32 2, %v918
      %v920 = vrot.slane %v221, %v919
      %v921 = vadd.f32 %v916, %v920
      %vm922 = vcmp.ge.f32.partialorder %v921, 0.0
      %v923 = vmul.f32 %v921, 0.01
      %v924 = vsel %vm922, %v921, %v923
      %925 = vst.msk [vmem:[%s219] sm:$0xff] %vm478, %v924
      %p926 = scmp.lt.s32.totalorder %s16, 1
      %s927 = scalar_select %p926, %s16, 1
      %s928 = smul.addr %s927, 8
      %s929 = scalar_lea.vmem %s5, %s928
      // Predicated region
      $region41: #{forward.1} parent=39 // pred_check
        %p930 = pneg %p144
      $region42: #{forward.1} parent=39 // pred_check_branch
        %932 = sbr.rel (%p930) target = $region44
      $region43: #{forward.1} parent=39 // pred_region
        _
      $region44: #{forward.1} parent=39 // pred_fallthru
        _
    $region40: #{forward.1} parent=5 // pred_fallthru
      _
    %p933 = scmp.le.s32.totalorder 2, %s11
    // Predicated region
    $region45: #{forward.1} parent=5 // pred_check
      %p934 = pneg %p933
    $region46: #{forward.1} parent=5 // pred_check_branch
      %936 = sbr.rel (%p934) target = $region48
    $region47: #{forward.1} parent=5 // pred_region
      %s937 = ssub.s32 %s11, 2
      // Predicated region
      $region49: #{forward.1} parent=47 // pred_check
        %p938 = pneg %p150
      $region50: #{forward.1} parent=47 // pred_check_branch
        %940 = sbr.rel (%p938) target = $region52
      $region51: #{forward.1} parent=47 // pred_region
        %p941 = scmp.lt.s32.totalorder %s17, 1
        %s942 = scalar_select %p941, %s17, 1
        %s943 = smul.addr %s942, 8
        %s944 = scalar_lea.vmem %s5, %s943
      $region52: #{forward.1} parent=47 // pred_fallthru
        _
    $region48: #{forward.1} parent=5 // pred_fallthru
      _
  $region6: #{forward.1} parent=0 // loop_footer
    %s15 = sadd.s32 1, %s11
  $region7: #{forward.1} parent=0 // loop_footer_branch
    %10 = sbr.rel target = $region3
  $region8: #{forward.1} parent=0 // loop_exit
    _

</llo_original>
